<compile_context>
chip_gen: v7x
topology: tpu7x:2x2x1
jax: 0.10.0
libtpu: 0.0.40
codegen_flags: <defaults>
</compile_context>

<pallas_src>
import functools

import jax
import jax.numpy as jnp
from jax.experimental import pallas as pl
from jax.experimental.pallas import tpu as pltpu


_TARGET_BLOCK_BYTES = 1 << 20       # ~1 MiB input blocks: ~85% of HBM roofline
_MAX_BLOCK_BYTES = 4 << 20          # flat path refuses blocks bigger than this
_VMEM_LIMIT = 32 * 1024 * 1024


def _pack_partials(h_tv, w_tv):
    """Pack two f32 scalars into one lane-dense (1, 8, 128) vreg tile."""
    sub = jax.lax.broadcasted_iota(jnp.int32, (1, 8, 128), 1)
    lane = jax.lax.broadcasted_iota(jnp.int32, (1, 8, 128), 2)
    is_h = (sub == 0) & (lane == 0)
    is_w = (sub == 0) & (lane == 1)
    return jnp.where(is_h, h_tv, jnp.where(is_w, w_tv, 0.0))


def _tv_flat_kernel(x_ref, wmask_ref, out_ref, *, n_planes, block_planes,
                    row_len, mask_tail):
    """Lane-dense TV partials.

    x_ref:     VMEM tile (TB, H*W), native dtype (one plane per sublane row).
    wmask_ref: VMEM tile (1, H*W-1) f32; 0.0 where a shift-by-1 diff crosses
               a row boundary, 1.0 elsewhere.
    out_ref:   VMEM tile (1, 8, 128) f32; [0,0,0] = h partial, [0,0,1] = w.
    """
    x = x_ref[...].astype(jnp.float32)                       # (TB, H*W)

    if mask_tail:
        # Zero planes past the end of the real array (last, ragged block).
        valid = n_planes - pl.program_id(0) * block_planes
        plane = jax.lax.broadcasted_iota(jnp.int32, x.shape, 0)
        x = jnp.where(plane < valid, x, 0.0)

    # Vertical diffs: shift by one row (W lanes) -- exact, no masking needed.
    dh = x[:, row_len:] - x[:, :-row_len]                    # (TB, (H-1)*W)
    # Horizontal diffs: shift by one lane; mask out row-boundary crossings.
    dw = x[:, 1:] - x[:, :-1]                                # (TB, H*W-1)

    h_tv = jnp.sum(dh * dh)
    w_tv = jnp.sum(dw * dw * wmask_ref[...])
    out_ref[...] = _pack_partials(h_tv, w_tv)


def _tv_plane_kernel(x_ref, out_ref, *, n_planes, block_planes, mask_tail):
    """Fallback (previously verified) whole-plane TV partials.

    x_ref:   VMEM tile (TB, H, W) native dtype.
    out_ref: VMEM tile (1, 8, 128) f32.
    """
    x = x_ref[...].astype(jnp.float32)                       # (TB, H, W)

    if mask_tail:
        valid = n_planes - pl.program_id(0) * block_planes
        plane = jax.lax.broadcasted_iota(jnp.int32, x.shape, 0)
        x = jnp.where(plane < valid, x, 0.0)

    dh = x[:, 1:, :] - x[:, :-1, :]
    dw = x[:, :, 1:] - x[:, :, :-1]
    out_ref[...] = _pack_partials(jnp.sum(dh * dh), jnp.sum(dw * dw))


def _partials_flat(x2d, *, N, P, W, tb):
    num_blocks = -(-N // tb)
    mask_tail = (N % tb) != 0

    # Row-boundary mask for the shift-by-1 diffs, built outside the kernel.
    idx = jnp.arange(P - 1, dtype=jnp.int32)
    wmask = (jnp.mod(idx, W) != (W - 1)).astype(jnp.float32).reshape(1, P - 1)

    kernel = functools.partial(
        _tv_flat_kernel, n_planes=N, block_planes=tb, row_len=W,
        mask_tail=mask_tail)

    return pl.pallas_call(
        kernel,
        out_shape=jax.ShapeDtypeStruct((num_blocks, 8, 128), jnp.float32),
        grid=(num_blocks,),
        in_specs=[
            pl.BlockSpec((tb, P), lambda i: (i, 0)),
            pl.BlockSpec((1, P - 1), lambda i: (0, 0)),   # fetched once
        ],
        out_specs=pl.BlockSpec((1, 8, 128), lambda i: (i, 0, 0)),
        compiler_params=pltpu.CompilerParams(
            dimension_semantics=("parallel",),
            vmem_limit_bytes=_VMEM_LIMIT,
        ),
    )(x2d, wmask)


def _partials_planes(x3d, *, N, H, W, tb):
    num_blocks = -(-N // tb)
    mask_tail = (N % tb) != 0

    kernel = functools.partial(
        _tv_plane_kernel, n_planes=N, block_planes=tb, mask_tail=mask_tail)

    return pl.pallas_call(
        kernel,
        out_shape=jax.ShapeDtypeStruct((num_blocks, 8, 128), jnp.float32),
        grid=(num_blocks,),
        in_specs=[pl.BlockSpec((tb, H, W), lambda i: (i, 0, 0))],
        out_specs=pl.BlockSpec((1, 8, 128), lambda i: (i, 0, 0)),
        compiler_params=pltpu.CompilerParams(
            dimension_semantics=("parallel",),
            vmem_limit_bytes=_VMEM_LIMIT,
        ),
    )(x3d)


def tv_loss(x, tv_loss_weight: float = 1.0):
    """Pallas TPU implementation of TVLoss.forward (returns an f32 scalar).

    Precondition (same as the PyTorch module): H > 1 and W > 1, otherwise
    the normalization divides by zero.
    """
    B, C, H, W = x.shape
    N = B * C
    P = H * W
    plane_bytes = P * x.dtype.itemsize

    # Lane-dense flattened path: blocks of (TB, H*W) planes.  TB must be a
    # multiple of 8 (sublane dim) or equal to N; aim for ~1 MiB per block.
    if N <= 8:
        tb = N
    else:
        tb = int(_TARGET_BLOCK_BYTES // plane_bytes)
        tb = max(8, (tb // 8) * 8)
        tb = min(tb, N)

    if tb * plane_bytes <= _MAX_BLOCK_BYTES:
        partials = _partials_flat(x.reshape(N, P), N=N, P=P, W=W, tb=tb)
    else:
        # Very large planes: whole-plane fallback (one or a few planes/block).
        # TODO(synk): planes that individually exceed VMEM would need
        # halo-tiled spatial blocking; not implemented here.
        tb3 = int(min(N, max(1, _TARGET_BLOCK_BYTES // plane_bytes)))
        partials = _partials_planes(x.reshape(N, H, W), N=N, H=H, W=W, tb=tb3)

    h_tv = jnp.sum(partials[:, 0, 0])
    w_tv = jnp.sum(partials[:, 0, 1])

    count_h = float(C * (H - 1) * W)
    count_w = float(C * H * (W - 1))
    scale = 2.0 * float(tv_loss_weight) / float(B)
    return scale * (h_tv / count_h + w_tv / count_w)


def tv_loss_ref(x, tv_loss_weight: float = 1.0):
    """Pure-JAX reference mirroring the PyTorch forward exactly."""
    x = x.astype(jnp.float32)
    B, C, H, W = x.shape
    count_h = C * (H - 1) * W
    count_w = C * H * (W - 1)
    h_tv = jnp.sum((x[:, :, 1:, :] - x[:, :, :H - 1, :]) ** 2)
    w_tv = jnp.sum((x[:, :, :, 1:] - x[:, :, :, :W - 1]) ** 2)
    return tv_loss_weight * 2.0 * (h_tv / count_h + w_tv / count_w) / B


if __name__ == "__main__":
    key = jax.random.PRNGKey(0)
    B, C, H, W = 2, 4, 16, 16
    x = jax.random.normal(key, (B, C, H, W), dtype=jnp.float32)

    out = tv_loss(x, tv_loss_weight=1.0)
    out = jax.block_until_ready(out)

    ref = tv_loss_ref(x, tv_loss_weight=1.0)
    assert jnp.allclose(out, ref, rtol=1e-5, atol=1e-5), (out, ref)

    print("KERNEL_OK")
</pallas_src>

<mosaic_0001>
module attributes {stable_mosaic.version = 11 : i64} {
  func.func @_tv_flat_kernel(%arg0: i32, %arg1: memref<8x256xf32, #tpu.memory_space<vmem>>, %arg2: memref<1x255xf32, #tpu.memory_space<vmem>>, %arg3: memref<1x8x128xf32, #tpu.memory_space<vmem>>) attributes {dimension_semantics = [#tpu.dimension_semantics<parallel>], iteration_bounds = array<i64: 1>, scalar_prefetch = 0 : i64, scratch_operands = 0 : i64, tpu.core_type = #tpu.core_type<tc>, window_params = [{transform_indices = @transform_0, window_bounds = array<i64: 8, 256>}, {pipeline_mode = #tpu.pipeline_mode<synchronous>, transform_indices = @transform_1, window_bounds = array<i64: 1, 255>}, {transform_indices = @transform_2, window_bounds = array<i64: 1, 8, 128>}]} {
    %c0 = arith.constant 0 : index
    %c0_0 = arith.constant 0 : index
    %0 = vector.load %arg1[%c0, %c0_0] : memref<8x256xf32, #tpu.memory_space<vmem>>, vector<8x256xf32>
    %1 = vector.extract_strided_slice %0 {offsets = [0, 16], sizes = [8, 240], strides = [1, 1]} : vector<8x256xf32> to vector<8x240xf32>
    %2 = vector.extract_strided_slice %0 {offsets = [0, 0], sizes = [8, 240], strides = [1, 1]} : vector<8x256xf32> to vector<8x240xf32>
    %3 = arith.subf %1, %2 : vector<8x240xf32>
    %4 = vector.extract_strided_slice %0 {offsets = [0, 1], sizes = [8, 255], strides = [1, 1]} : vector<8x256xf32> to vector<8x255xf32>
    %5 = vector.extract_strided_slice %0 {offsets = [0, 0], sizes = [8, 255], strides = [1, 1]} : vector<8x256xf32> to vector<8x255xf32>
    %6 = arith.subf %4, %5 : vector<8x255xf32>
    %7 = arith.mulf %3, %3 : vector<8x240xf32>
    %8 = vector.shape_cast %7 : vector<8x240xf32> to vector<1x8x240xf32>
    %cst = arith.constant dense<0.000000e+00> : vector<1xf32>
    %9 = vector.multi_reduction <add>, %8, %cst [1, 2] : vector<1x8x240xf32> to vector<1xf32>
    %10 = vector.shape_cast %9 : vector<1xf32> to vector<1x1x1xf32>
    %11 = vector.extract %10[0, 0, 0] : f32 from vector<1x1x1xf32>
    %12 = arith.mulf %6, %6 : vector<8x255xf32>
    %c0_1 = arith.constant 0 : index
    %c0_2 = arith.constant 0 : index
    %13 = vector.load %arg2[%c0_1, %c0_2] : memref<1x255xf32, #tpu.memory_space<vmem>>, vector<1x255xf32>
    %14 = vector.broadcast %13 : vector<1x255xf32> to vector<8x255xf32>
    %15 = arith.mulf %12, %14 : vector<8x255xf32>
    %16 = vector.shape_cast %15 : vector<8x255xf32> to vector<1x8x255xf32>
    %cst_3 = arith.constant dense<0.000000e+00> : vector<1xf32>
    %17 = vector.multi_reduction <add>, %16, %cst_3 [1, 2] : vector<1x8x255xf32> to vector<1xf32>
    %18 = vector.shape_cast %17 : vector<1xf32> to vector<1x1x1xf32>
    %19 = vector.extract %18[0, 0, 0] : f32 from vector<1x1x1xf32>
    %20 = tpu.iota {dimensions = array<i32: 1>} : vector<1x8x128xi32>
    %21 = tpu.iota {dimensions = array<i32: 2>} : vector<1x8x128xi32>
    %c0_i32 = arith.constant 0 : i32
    %22 = vector.broadcast %c0_i32 : i32 to vector<1x8x128xi32>
    %23 = arith.cmpi eq, %20, %22 : vector<1x8x128xi32>
    %c0_i32_4 = arith.constant 0 : i32
    %24 = vector.broadcast %c0_i32_4 : i32 to vector<1x8x128xi32>
    %25 = arith.cmpi eq, %21, %24 : vector<1x8x128xi32>
    %26 = arith.andi %23, %25 : vector<1x8x128xi1>
    %c0_i32_5 = arith.constant 0 : i32
    %27 = vector.broadcast %c0_i32_5 : i32 to vector<1x8x128xi32>
    %28 = arith.cmpi eq, %20, %27 : vector<1x8x128xi32>
    %c1_i32 = arith.constant 1 : i32
    %29 = vector.broadcast %c1_i32 : i32 to vector<1x8x128xi32>
    %30 = arith.cmpi eq, %21, %29 : vector<1x8x128xi32>
    %31 = arith.andi %28, %30 : vector<1x8x128xi1>
    %cst_6 = arith.constant 0.000000e+00 : f32
    %32 = vector.broadcast %19 : f32 to vector<1x8x128xf32>
    %33 = vector.broadcast %cst_6 : f32 to vector<1x8x128xf32>
    %34 = arith.select %31, %32, %33 : vector<1x8x128xi1>, vector<1x8x128xf32>
    %35 = vector.broadcast %11 : f32 to vector<1x8x128xf32>
    %36 = arith.select %26, %35, %34 : vector<1x8x128xi1>, vector<1x8x128xf32>
    %c0_7 = arith.constant 0 : index
    %c0_8 = arith.constant 0 : index
    %c0_9 = arith.constant 0 : index
    %37 = vector.load %arg3[%c0_7, %c0_8, %c0_9] : memref<1x8x128xf32, #tpu.memory_space<vmem>>, vector<1x8x128xf32>
    tpu.vector_store %arg3[%c0_7, %c0_8, %c0_9], %36 {strides = array<i32>} : memref<1x8x128xf32, #tpu.memory_space<vmem>>, vector<1x8x128xf32>,
    return
  }
  func.func @transform_0(%arg0: i32) -> (i32, i32) {
    %c0_i32 = arith.constant 0 : i32
    %c0_i32_0 = arith.constant 0 : i32
    return %arg0, %c0_i32 : i32, i32
  }
  func.func @transform_1(%arg0: i32) -> (i32, i32) {
    %c0_i32 = arith.constant 0 : i32
    %c0_i32_0 = arith.constant 0 : i32
    %c0_i32_1 = arith.constant 0 : i32
    return %c0_i32, %c0_i32_0 : i32, i32
  }
  func.func @transform_2(%arg0: i32) -> (i32, i32, i32) {
    %c0_i32 = arith.constant 0 : i32
    %c0_i32_0 = arith.constant 0 : i32
    %c0_i32_1 = arith.constant 0 : i32
    return %arg0, %c0_i32, %c0_i32_0 : i32, i32, i32
  }
}

</mosaic_0001>

<llo_original>
// kernel: tpu_custom_call.1
$region0: #{tpu_custom_call.1}
  #allocation0 [shape = 'u32[]', space=smem, size = 0x4, offset = 0x4, fixed_abs, tag = 'smem constant byte address 0x4 - core index']
  #allocation1 [shape = 'u32[144,128]{1,0:T(1,128)}', space=vmem, size = 0x12000, scoped, tag = 'internal scratch']
  %s0 = inlined_call_operand.hbm [shape: f32[8,256], index: 0, kind: input, shape index: {}]
  %s1 = inlined_call_operand.vmem [shape: f32[1,255], index: 1, kind: input, shape index: {}]
  %s2 = inlined_call_operand.hbm [shape: f32[1,8,128], index: 2, kind: output, shape index: {}]
  %s3 = sld [smem:[#allocation0]]
  $region22: #{tpu_custom_call.1} parent=0
    _
  %s5 = ssub.s32 1, %s3
  %s6 = scalar_select 0, %s5, %s3
  $region1: #{tpu_custom_call.1} parent=0
    #allocation2 [shape = 'u8[8192]{0}', space=vmem, size = 0x2000, scoped, tag = 'input window, operand 0, single buffered']
    #allocation3 [shape = 's32[1]{0}', space=sflag, size = 0x4, scoped, tag = 'scoped memory for tpu_custom_call.1']
    #allocation4 [shape = 's32[1]{0}', space=sflag, size = 0x4, scoped, tag = 'scoped memory for tpu_custom_call.1']
    #allocation5 [shape = 'u8[4096]{0}', space=vmem, size = 0x1000, scoped, tag = 'output window, operand 0, single buffered']
    %7 = vsyncpa [#allocation3], 0
    %8 = vsyncpa [#allocation4], 0
    // Predicated region
    $region2: #{tpu_custom_call.1} parent=1 // pred_check
      _
    $region3: #{tpu_custom_call.1} parent=1 // pred_check_branch
      %10 = sbr.rel (0) target = $region5
    $region4: #{tpu_custom_call.1} parent=1 // pred_region
      %s12 = ssub.s32 256, 256
      %13 = vsyncadd [#allocation3], %s12
      %s15 = sshll.u32 [#allocation2], 4
      %s16 = int_to_ptr.vmem [resolvable:$true] %s15
      %18 = dma.hbm_to_vmem [thread:$0]  %s0, 256, %s16, [#allocation3]
    $region5: #{tpu_custom_call.1} parent=1 // pred_fallthru
      _
    // Predicated region
    $region6: #{tpu_custom_call.1} parent=1 // pred_check
      _
    $region7: #{tpu_custom_call.1} parent=1 // pred_check_branch
      %20 = sbr.rel (0) target = $region9
    $region8: #{tpu_custom_call.1} parent=1 // pred_region
      _
    $region9: #{tpu_custom_call.1} parent=1 // pred_fallthru
      _
    // Predicated region
    $region10: #{tpu_custom_call.1} parent=1 // pred_check
      _
    $region11: #{tpu_custom_call.1} parent=1 // pred_check_branch
      %22 = sbr.rel (0) target = $region13
    $region12: #{tpu_custom_call.1} parent=1 // pred_region
      %23 = dma.done [#allocation3], 256
    $region13: #{tpu_custom_call.1} parent=1 // pred_fallthru
      _
    %v24 = vld [vmem:[#allocation2] sm:$0xff]
    %v25 = vld [vmem:[#allocation2 + $0x8] sm:$0xff]
    %28 = vrot.lane.b32.xlu0 %v24, 16
    %v29 = vpop.permute.xlu0 %28
    %30 = vrot.lane.b32.xlu0 %v25, 16
    %v31 = vpop.permute.xlu0 %30
    %vm32 = vcmask 130048
    %v33 = vsel %vm32, %v29, %v31
    %v36 = vsub.f32 %v24, %v29
    %v37 = vsub.f32 %v25, %v33
    %38 = vrot.lane.b32.xlu0 %v24, 1
    %v39 = vpop.permute.xlu0 %38
    %40 = vrot.lane.b32.xlu0 %v25, 1
    %v41 = vpop.permute.xlu0 %40
    %vm42 = vcmask 7168
    %v43 = vsel %vm42, %v39, %v41
    %v46 = vsub.f32 %v24, %v39
    %v47 = vsub.f32 %v25, %v43
    %v48 = vmul.f32 %v36, %v36
    %v49 = vmul.f32 %v37, %v37
    %52 = vrot.lane.b32.xlu0 %v48, 112
    %v53 = vpop.permute.xlu0 %52
    %54 = vrot.lane.b32.xlu0 %v49, 112
    %v55 = vpop.permute.xlu0 %54
    %vm56 = vcmask 916480
    %v57 = vsel %vm56, %v53, %v55
    %v60 = vsel %vm56, %v55, 0.0
    %v61 = vadd.f32 %v57, %v60
    %62 = vadd.xlane.f32.xlu0 %v61
    %v63 = vpop.xlane.xlu0 %62
    %v64 = vrot.slane %v63, 4
    %v65 = vadd.f32 %v63, %v64
    %v66 = vrot.slane %v65, 2
    %v67 = vadd.f32 %v65, %v66
    %v68 = vrot.slane %v67, 1
    %v69 = vadd.f32 %v67, %v68
    %s70 = vtos %v69
    %v71 = vmul.f32 %v46, %v46
    %v72 = vmul.f32 %v47, %v47
    %v73 = vld [vmem:[%s1] sm:$0x3]
    %v75 = vlaneseq
    %v76 = vshrl.u32 %v75, 7
    %v77 = vsub.s32 0, %v76
    %v78 = vrot.slane %v73, %v77
    %v79 = vlaneseq
    %v80 = vshrl.u32 %v79, 7
    %v81 = vsub.s32 1, %v80
    %v82 = vrot.slane %v73, %v81
    %83 = vrot.lane.b32.xlu0 %v78, 1
    %v84 = vpop.permute.xlu0 %83
    %85 = vrot.lane.b32.xlu0 %v82, 1
    %v86 = vpop.permute.xlu0 %85
    %v87 = vsel %vm42, %v84, %v86
    %v90 = vmul.f32 %v71, %v84
    %v91 = vmul.f32 %v72, %v87
    %94 = vrot.lane.b32.xlu0 %v90, 127
    %v95 = vpop.permute.xlu0 %94
    %96 = vrot.lane.b32.xlu0 %v91, 127
    %v97 = vpop.permute.xlu0 %96
    %vm98 = vcmask 1039360
    %v99 = vsel %vm98, %v95, %v97
    %v102 = vsel %vm98, %v97, 0.0
    %v103 = vadd.f32 %v99, %v102
    %104 = vadd.xlane.f32.xlu0 %v103
    %v105 = vpop.xlane.xlu0 %104
    %v106 = vrot.slane %v105, 4
    %v107 = vadd.f32 %v105, %v106
    %v108 = vrot.slane %v107, 2
    %v109 = vadd.f32 %v107, %v108
    %v110 = vrot.slane %v109, 1
    %v111 = vadd.f32 %v109, %v110
    %s112 = vtos %v111
    %v113 = vlaneseq
    %v114 = vshrl.u32 %v113, 7
    %v115 = vlaneseq
    %v116 = vand.u32 %v115, 127
    %vm117 = vcmp.eq.s32.totalorder %v114, 0
    %vm118 = vcmp.eq.s32.totalorder %v116, 0
    %vm119 = vmand %vm117, %vm118
    %vm120 = vcmp.eq.s32.totalorder %v116, 1
    %vm121 = vmand %vm117, %vm120
    %v122 = vstv %s112
    %v123 = vsel %vm121, %v122, 0.0
    %v124 = vstv %s70
    %v125 = vsel %vm119, %v124, %v123
    %126 = vst [vmem:[#allocation5] sm:$0xff] %v125
    // Predicated region
    $region14: #{tpu_custom_call.1} parent=1 // pred_check
      _
    $region15: #{tpu_custom_call.1} parent=1 // pred_check_branch
      %128 = sbr.rel (0) target = $region17
    $region16: #{tpu_custom_call.1} parent=1 // pred_region
      %s130 = ssub.s32 128, 128
      %131 = vsyncadd [#allocation4], %s130
      %s133 = sshll.u32 [#allocation5], 4
      %s134 = int_to_ptr.vmem [resolvable:$true] %s133
      %136 = dma.vmem_to_hbm [thread:$0]  %s134, 128, %s2, [#allocation4]
    $region17: #{tpu_custom_call.1} parent=1 // pred_fallthru
      _
    // Predicated region
    $region18: #{tpu_custom_call.1} parent=1 // pred_check
      _
    $region19: #{tpu_custom_call.1} parent=1 // pred_check_branch
      %138 = sbr.rel (0) target = $region21
    $region20: #{tpu_custom_call.1} parent=1 // pred_region
      %139 = dma.done [#allocation4], 128
    $region21: #{tpu_custom_call.1} parent=1 // pred_fallthru
      _
    %140 = vsyncpa [#allocation3], 1
    %141 = vsyncpa [#allocation4], 1

</llo_original>
